<compile_context>
chip_gen: v7x
topology: tpu7x:2x2x1
jax: 0.10.0
libtpu: 0.0.40
codegen_flags: <defaults>
</compile_context>

<pallas_src>
import jax
import jax.numpy as jnp
from jax.experimental import pallas as pl
from jax.experimental.pallas import tpu as pltpu


def build_grid(resolution):
    """JAX replica of the PyTorch build_grid (torch.meshgrid default = 'ij')."""
    ranges = [jnp.linspace(0.0, 1.0, num=r, dtype=jnp.float32) for r in resolution]
    mesh = jnp.meshgrid(*ranges, indexing="ij")
    grid = jnp.stack(mesh, axis=-1).reshape(resolution[0], resolution[1], -1)
    grid = grid[None]                                        # (1, H, W, 2)
    return jnp.concatenate([grid, 1.0 - grid], axis=-1)      # (1, H, W, 4)


def _soft_pos_kernel(g_ref, w_ref, b_ref, x_ref, o_ref):
    # g_ref: (block_rows, 2) fp32  -- (x, y) coords for this spatial tile
    # w_ref: (2, D) fp32 folded weight; b_ref: (1, D) fp32 folded bias
    # x_ref/o_ref: (block_rows, D) in the model's native activation dtype
    g = g_ref[...]
    w = w_ref[...]
    pos = b_ref[...]                               # (1, D), broadcasts over rows
    # 2-wide contraction as VPU broadcast-FMAs (exact fp32, no MXU needed).
    for c in range(2):
        pos = pos + g[:, c:c + 1] * w[c:c + 1, :]
    o_ref[...] = (x_ref[...].astype(jnp.float32) + pos).astype(o_ref.dtype)


def _round_up(x, m):
    return (x + m - 1) // m * m


def _default_block_bytes_cap():
    # Generation-aware per-block byte cap (per IO block; each of in/out is
    # double-buffered, so total VMEM ~= 4x this + tiny grid/param buffers).
    try:
        kind = jax.devices()[0].device_kind.lower()
    except Exception:  # pragma: no cover
        kind = ""
    if "v6" in kind:
        return 8 << 20      # v6e: 128 MiB physical VMEM, raise the cap
    if "v5" in kind:
        return 2 << 20      # v5e: 16 MiB default scoped VMEM -> stay small
    return 3 << 20          # v7x (64 MiB/TC, 2 cores) / unknown: headroom


def soft_position_embed(inputs, grid, w, b, block_rows=None, block_bytes_cap=None):
    """inputs: (B, H, W, D) any float dtype; grid: (1, H, W, 4) from build_grid;
    w: (D, 4) nn.Linear weight; b: (D,) nn.Linear bias."""
    B, H, W, D = inputs.shape
    HW = H * W
    io_dtype = inputs.dtype
    itemsize = jnp.dtype(io_dtype).itemsize

    # Fold the 4 grid channels [x, y, 1-x, 1-y] into 2 (build_grid guarantees
    # channels 2,3 == 1 - channels 0,1):
    #   pos = x*(w0-w2) + y*(w1-w3) + (b + w2 + w3)
    w32 = w.astype(jnp.float32)
    b32 = b.astype(jnp.float32)
    w_eff = jnp.transpose(w32[:, :2] - w32[:, 2:]).reshape(2, D)   # (2, D)
    b_eff = (b32 + w32[:, 2] + w32[:, 3]).reshape(1, D)            # (1, D)
    g2 = grid.reshape(HW, 4)[:, :2].astype(jnp.float32)            # (HW, 2)

    # --- tile selection ---------------------------------------------------
    if block_bytes_cap is None:
        block_bytes_cap = _default_block_bytes_cap()

    if block_rows is None:
        cap_rows = max(8, (block_bytes_cap // max(1, D * itemsize)) // 8 * 8)
        block_rows = 0
        start = min(cap_rows, (HW // 8) * 8)
        for cand in range(start, 7, -8):
            if HW % cand == 0:
                block_rows = cand
                break
        if block_rows == 0:
            # No multiple-of-8 divisor of HW under the cap: pad spatial rows.
            block_rows = min(cap_rows, _round_up(HW, 8))
        HW_pad = _round_up(HW, block_rows)
        n_tiles = HW_pad // block_rows
        # v7x megacore: guarantee >= 2 grid steps so both TensorCores get work.
        if B * n_tiles < 2 and block_rows >= 16 and block_rows % 16 == 0:
            block_rows //= 2
            n_tiles = HW_pad // block_rows
    else:
        assert block_rows % 8 == 0, "block_rows must be a multiple of 8"
        HW_pad = _round_up(HW, block_rows)
        n_tiles = HW_pad // block_rows

    total_steps = B * n_tiles

    # --- pack activations into a contiguous (B*HW_pad, D) row slab ---------
    x = inputs.reshape(B, HW, D)
    if HW_pad != HW:
        x = jnp.pad(x, ((0, 0), (0, HW_pad - HW), (0, 0)))
        g2 = jnp.pad(g2, ((0, HW_pad - HW), (0, 0)))
    x = x.reshape(B * HW_pad, D)

    # --- explicit scoped-VMEM budget: 2 (in+out) x 2 (double buffer) blocks,
    #     plus the (tiny) grid tile and parameter buffers, plus headroom. ----
    block_io_bytes = block_rows * D * itemsize
    grid_block_bytes = block_rows * 2 * 4
    param_bytes = (2 * D + D) * 4
    vmem_bytes = 2 * (2 * block_io_bytes + grid_block_bytes + param_bytes) + (4 << 20)
    vmem_limit_bytes = int(min(100 << 20, max(vmem_bytes, 16 << 20)))

    fn = pl.pallas_call(
        _soft_pos_kernel,
        out_shape=jax.ShapeDtypeStruct((B * HW_pad, D), io_dtype),
        grid_spec=pltpu.PrefetchScalarGridSpec(
            num_scalar_prefetch=0,
            grid=(total_steps,),
            in_specs=[
                pl.BlockSpec((block_rows, 2), lambda i: (i % n_tiles, 0)),  # grid tile
                pl.BlockSpec((2, D), lambda i: (0, 0)),                     # folded weight
                pl.BlockSpec((1, D), lambda i: (0, 0)),                     # folded bias
                pl.BlockSpec((block_rows, D), lambda i: (i, 0)),            # activations
            ],
            out_specs=pl.BlockSpec((block_rows, D), lambda i: (i, 0)),
        ),
        compiler_params=pltpu.CompilerParams(
            dimension_semantics=("parallel",),      # megacore-shardable
            vmem_limit_bytes=vmem_limit_bytes),
        input_output_aliases={3: 0},                # output aliases activations
    )
    out = fn(g2, w_eff, b_eff, x)
    out = out.reshape(B, HW_pad, D)[:, :HW, :].reshape(B, H, W, D)
    return out


def reference_forward(inputs, grid, w, b):
    """Pure-JAX replica of the PyTorch forward, for verification."""
    pos = jnp.einsum('bhwc,dc->bhwd', grid, w,
                     precision=jax.lax.Precision.HIGHEST) + b
    return inputs + pos            # pos broadcasts over batch (grid has B=1)


if __name__ == "__main__":
    B, H, W, D = 2, 16, 16, 128    # hidden=128 -> lane-dense output stores

    key = jax.random.PRNGKey(0)
    k_in, k_w, k_b = jax.random.split(key, 3)

    w = jax.random.normal(k_w, (D, 4), jnp.float32) * 0.1   # nn.Linear(4, D).weight
    b = jax.random.normal(k_b, (D,), jnp.float32) * 0.1     # nn.Linear(4, D).bias
    grid = build_grid((H, W))                                # (1, H, W, 4)

    # fp32 path (PyTorch default dtype).
    x32 = jax.random.normal(k_in, (B, H, W, D), jnp.float32)
    out32 = soft_position_embed(x32, grid, w, b)
    jax.block_until_ready(out32)
    ref32 = reference_forward(x32, grid, w, b)
    assert out32.shape == (B, H, W, D) and out32.dtype == x32.dtype
    assert jnp.allclose(out32, ref32, atol=1e-5, rtol=1e-5)

    # bf16 activation path (I/O stays bf16; compute upcast happens in-kernel).
    x16 = x32.astype(jnp.bfloat16)
    out16 = soft_position_embed(x16, grid, w, b)
    jax.block_until_ready(out16)
    ref16 = reference_forward(x16.astype(jnp.float32), grid, w, b).astype(jnp.bfloat16)
    assert out16.dtype == jnp.bfloat16
    assert jnp.allclose(out16.astype(jnp.float32), ref16.astype(jnp.float32),
                        atol=1e-2, rtol=1e-2)

    print("KERNEL_OK")
</pallas_src>

<mosaic_0001>
module attributes {stable_mosaic.version = 11 : i64} {
  func.func @_soft_pos_kernel(%arg0: i32, %arg1: memref<256x2xf32, #tpu.memory_space<vmem>>, %arg2: memref<2x128xf32, #tpu.memory_space<vmem>>, %arg3: memref<1x128xf32, #tpu.memory_space<vmem>>, %arg4: memref<256x128xf32, #tpu.memory_space<vmem>>, %arg5: memref<256x128xf32, #tpu.memory_space<vmem>>) attributes {dimension_semantics = [#tpu.dimension_semantics<parallel>], iteration_bounds = array<i64: 2>, scalar_prefetch = 0 : i64, scratch_operands = 0 : i64, tpu.core_type = #tpu.core_type<tc>, window_params = [{transform_indices = @transform_0, window_bounds = array<i64: 256, 2>}, {pipeline_mode = #tpu.pipeline_mode<synchronous>, transform_indices = @transform_1, window_bounds = array<i64: 2, 128>}, {pipeline_mode = #tpu.pipeline_mode<synchronous>, transform_indices = @transform_2, window_bounds = array<i64: 1, 128>}, {transform_indices = @transform_3, window_bounds = array<i64: 256, 128>}, {transform_indices = @transform_4, window_bounds = array<i64: 256, 128>}]} {
    %c0 = arith.constant 0 : index
    %c0_0 = arith.constant 0 : index
    %0 = vector.load %arg1[%c0, %c0_0] : memref<256x2xf32, #tpu.memory_space<vmem>>, vector<256x2xf32>
    %c0_1 = arith.constant 0 : index
    %c0_2 = arith.constant 0 : index
    %1 = vector.load %arg2[%c0_1, %c0_2] : memref<2x128xf32, #tpu.memory_space<vmem>>, vector<2x128xf32>
    %c0_3 = arith.constant 0 : index
    %c0_4 = arith.constant 0 : index
    %2 = vector.load %arg3[%c0_3, %c0_4] : memref<1x128xf32, #tpu.memory_space<vmem>>, vector<1x128xf32>
    %3 = vector.extract_strided_slice %0 {offsets = [0, 0], sizes = [256, 1], strides = [1, 1]} : vector<256x2xf32> to vector<256x1xf32>
    %4 = vector.extract_strided_slice %1 {offsets = [0, 0], sizes = [1, 128], strides = [1, 1]} : vector<2x128xf32> to vector<1x128xf32>
    %5 = vector.broadcast %3 : vector<256x1xf32> to vector<256x128xf32>
    %6 = vector.broadcast %4 : vector<1x128xf32> to vector<256x128xf32>
    %7 = arith.mulf %5, %6 : vector<256x128xf32>
    %8 = vector.broadcast %2 : vector<1x128xf32> to vector<256x128xf32>
    %9 = arith.addf %8, %7 : vector<256x128xf32>
    %10 = vector.extract_strided_slice %0 {offsets = [0, 1], sizes = [256, 1], strides = [1, 1]} : vector<256x2xf32> to vector<256x1xf32>
    %11 = vector.extract_strided_slice %1 {offsets = [1, 0], sizes = [1, 128], strides = [1, 1]} : vector<2x128xf32> to vector<1x128xf32>
    %12 = vector.broadcast %10 : vector<256x1xf32> to vector<256x128xf32>
    %13 = vector.broadcast %11 : vector<1x128xf32> to vector<256x128xf32>
    %14 = arith.mulf %12, %13 : vector<256x128xf32>
    %15 = arith.addf %9, %14 : vector<256x128xf32>
    %c0_5 = arith.constant 0 : index
    %c0_6 = arith.constant 0 : index
    %16 = vector.load %arg4[%c0_5, %c0_6] : memref<256x128xf32, #tpu.memory_space<vmem>>, vector<256x128xf32>
    %17 = arith.addf %16, %15 : vector<256x128xf32>
    %c0_7 = arith.constant 0 : index
    %c0_8 = arith.constant 0 : index
    %18 = vector.load %arg5[%c0_7, %c0_8] : memref<256x128xf32, #tpu.memory_space<vmem>>, vector<256x128xf32>
    tpu.vector_store %arg5[%c0_7, %c0_8], %17 {strides = array<i32>} : memref<256x128xf32, #tpu.memory_space<vmem>>, vector<256x128xf32>,
    return
  }
  func.func @transform_0(%arg0: i32) -> (i32, i32) {
    %c1_i32 = arith.constant 1 : i32
    %c0_i32 = arith.constant 0 : i32
    %0 = arith.cmpi eq, %c1_i32, %c0_i32 : i32
    %c1_i32_0 = arith.constant 1 : i32
    %1 = arith.select %0, %c1_i32_0, %c1_i32 : i32
    %2 = arith.remsi %arg0, %1 : i32
    %c0_i32_1 = arith.constant 0 : i32
    %3 = arith.cmpi ne, %2, %c0_i32_1 : i32
    %c0_i32_2 = arith.constant 0 : i32
    %4 = arith.cmpi slt, %2, %c0_i32_2 : i32
    %c0_i32_3 = arith.constant 0 : i32
    %5 = arith.cmpi slt, %1, %c0_i32_3 : i32
    %6 = arith.xori %4, %5 : i1
    %7 = arith.andi %6, %3 : i1
    %8 = arith.addi %2, %1 : i32
    %9 = arith.select %7, %8, %2 : i32
    %c0_i32_4 = arith.constant 0 : i32
    %c0_i32_5 = arith.constant 0 : i32
    return %9, %c0_i32_4 : i32, i32
  }
  func.func @transform_1(%arg0: i32) -> (i32, i32) {
    %c0_i32 = arith.constant 0 : i32
    %c0_i32_0 = arith.constant 0 : i32
    %c0_i32_1 = arith.constant 0 : i32
    return %c0_i32, %c0_i32_0 : i32, i32
  }
  func.func @transform_2(%arg0: i32) -> (i32, i32) {
    %c0_i32 = arith.constant 0 : i32
    %c0_i32_0 = arith.constant 0 : i32
    %c0_i32_1 = arith.constant 0 : i32
    return %c0_i32, %c0_i32_0 : i32, i32
  }
  func.func @transform_3(%arg0: i32) -> (i32, i32) {
    %c0_i32 = arith.constant 0 : i32
    %c0_i32_0 = arith.constant 0 : i32
    return %arg0, %c0_i32 : i32, i32
  }
  func.func @transform_4(%arg0: i32) -> (i32, i32) {
    %c0_i32 = arith.constant 0 : i32
    %c0_i32_0 = arith.constant 0 : i32
    return %arg0, %c0_i32 : i32, i32
  }
}

</mosaic_0001>

<llo_original>
// kernel: tpu_custom_call.1
$region0: #{tpu_custom_call.1}
  #allocation0 [shape = 'u32[]', space=smem, size = 0x4, offset = 0x4, fixed_abs, tag = 'smem constant byte address 0x4 - core index']
  #allocation1 [shape = 'u32[144,128]{1,0:T(1,128)}', space=vmem, size = 0x12000, scoped, tag = 'internal scratch']
  %s0 = inlined_call_operand.vmem [shape: f32[256,2], index: 0, kind: input, shape index: {}]
  %s1 = inlined_call_operand.vmem [shape: f32[2,128], index: 1, kind: input, shape index: {}]
  %s2 = inlined_call_operand.vmem [shape: f32[1,128], index: 2, kind: input, shape index: {}]
  %s3 = inlined_call_operand.hbm [shape: f32[512,128], index: 3, kind: input, shape index: {}, may-alias: {3,4}]
  %s4 = inlined_call_operand.hbm [shape: f32[512,128], index: 4, kind: output, shape index: {}, may-alias: {3,4}]
  %s5 = sld [smem:[#allocation0]]
  $region53: #{tpu_custom_call.1} parent=0
    _
  %s7 = ssub.s32 1, %s5
  %s8 = scalar_select 0, %s7, %s5
  $region1: #{tpu_custom_call.1} parent=0
    #allocation2 [shape = 'u8[262144]{0}', space=vmem, size = 0x40000, scoped, tag = 'input window, operand 3']
    #allocation3 [shape = 's32[2]{0}', space=sflag, size = 0x8, scoped, tag = 'scoped memory for tpu_custom_call.1']
    #allocation4 [shape = 's32[2]{0}', space=sflag, size = 0x8, scoped, tag = 'scoped memory for tpu_custom_call.1']
    #allocation5 [shape = 'u8[262144]{0}', space=vmem, size = 0x40000, scoped, tag = 'output window, operand 0']
    %9 = vsyncpa [#allocation3], 0
    %s10 = scalar_lea.sflag [#allocation3], 1
    %11 = vsyncpa %s10, 0
    %12 = vsyncpa [#allocation4], 0
    %s13 = scalar_lea.sflag [#allocation4], 1
    %14 = vsyncpa %s13, 0
    loop: start=0, step=1, limit=4
    $region2: #{tpu_custom_call.1} parent=1 // loop_pre_header
      _
    $region3: #{tpu_custom_call.1} parent=1 // loop_header
      %s16 = sphi 0, %s20
      %p17 = scmp.ge.s32.totalorder %s16, 4
      %s24 = sphi 0, %s24
      %s26 = sphi 0, %s24
      %s27 = sphi 0, %s26
      %s41 = sphi 0, %s27
      %s45 = sphi 0, %s45
      %s47 = sphi 0, %s45
      %s48 = sphi 0, %s47
      %s62 = sphi 0, %s48
      %s66 = sphi 0, %s66
      %s68 = sphi 0, %s66
      %s69 = sphi 0, %s68
      %s83 = sphi 0, %s69
      %s89 = sphi 0, %s91
      %s92 = sphi 0, %s89
      %s93 = sphi 0, %s92
      %s109 = sphi 0, %s93
      %s115 = sphi 0, %s117
      %s118 = sphi 0, %s115
      %s119 = sphi 0, %s118
      %s135 = sphi 0, %s119
    $region4: #{tpu_custom_call.1} parent=1 // loop_header_branch
      %19 = sbr.rel (%p17) target = $region8
    $region5: #{tpu_custom_call.1} parent=1 // loop_body
      %s21 = ssub.s32 %s16, 1
      %s22 = ssub.s32 %s16, 2
      %s23 = sadd.s32 %s16, 1
      %s25 = sadd.s32 %s24, 1
      %p28 = scmp.eq.s32.totalorder %s16, 1
      %p29 = scmp.ne.s32.totalorder %s24, %s26
      %p30 = scmp.eq.s32.totalorder %s16, 0
      %p31 = por %p29, %p30
      %p32 = scmp.ne.s32.totalorder %s24, %s26
      %p33 = scmp.eq.s32.totalorder %s21, 1
      %p34 = por %p32, %p33
      %p35 = scmp.ne.s32.totalorder %s26, %s27
      %p36 = scmp.eq.s32.totalorder %s21, 0
      %p37 = por %p35, %p36
      %p38 = scmp.ne.s32.totalorder %s26, %s27
      %p39 = scmp.eq.s32.totalorder %s22, 1
      %p40 = por %p38, %p39
      %p42 = scmp.ne.s32.totalorder %s27, %s41
      %p43 = scmp.eq.s32.totalorder %s22, 0
      %p44 = por %p42, %p43
      %s46 = sadd.s32 %s45, 1
      %p49 = scmp.eq.s32.totalorder %s16, 1
      %p50 = scmp.ne.s32.totalorder %s45, %s47
      %p51 = scmp.eq.s32.totalorder %s16, 0
      %p52 = por %p50, %p51
      %p53 = scmp.ne.s32.totalorder %s45, %s47
      %p54 = scmp.eq.s32.totalorder %s21, 1
      %p55 = por %p53, %p54
      %p56 = scmp.ne.s32.totalorder %s47, %s48
      %p57 = scmp.eq.s32.totalorder %s21, 0
      %p58 = por %p56, %p57
      %p59 = scmp.ne.s32.totalorder %s47, %s48
      %p60 = scmp.eq.s32.totalorder %s22, 1
      %p61 = por %p59, %p60
      %p63 = scmp.ne.s32.totalorder %s48, %s62
      %p64 = scmp.eq.s32.totalorder %s22, 0
      %p65 = por %p63, %p64
      %s67 = sadd.s32 %s66, 1
      %p70 = scmp.eq.s32.totalorder %s16, 1
      %p71 = scmp.ne.s32.totalorder %s66, %s68
      %p72 = scmp.eq.s32.totalorder %s16, 0
      %p73 = por %p71, %p72
      %p74 = scmp.ne.s32.totalorder %s66, %s68
      %p75 = scmp.eq.s32.totalorder %s21, 1
      %p76 = por %p74, %p75
      %p77 = scmp.ne.s32.totalorder %s68, %s69
      %p78 = scmp.eq.s32.totalorder %s21, 0
      %p79 = por %p77, %p78
      %p80 = scmp.ne.s32.totalorder %s68, %s69
      %p81 = scmp.eq.s32.totalorder %s22, 1
      %p82 = por %p80, %p81
      %p84 = scmp.ne.s32.totalorder %s69, %s83
      %p85 = scmp.eq.s32.totalorder %s22, 0
      %p86 = por %p84, %p85
      %s87 = ssub.s32 %s16, %s23
      %p88 = scmp.eq.s32.totalorder %s87, 0
      %s90 = sadd.s32 %s89, 1
      %s91 = scalar_select %p88, %s89, %s90
      %p94 = pneg %p88
      %p95 = scmp.eq.s32.totalorder %s16, 1
      %p96 = por %p94, %p95
      %p97 = scmp.ne.s32.totalorder %s89, %s92
      %p98 = scmp.eq.s32.totalorder %s16, 0
      %p99 = por %p97, %p98
      %p100 = scmp.ne.s32.totalorder %s89, %s92
      %p101 = scmp.eq.s32.totalorder %s21, 1
      %p102 = por %p100, %p101
      %p103 = scmp.ne.s32.totalorder %s92, %s93
      %p104 = scmp.eq.s32.totalorder %s21, 0
      %p105 = por %p103, %p104
      %p106 = scmp.ne.s32.totalorder %s92, %s93
      %p107 = scmp.eq.s32.totalorder %s22, 1
      %p108 = por %p106, %p107
      %p110 = scmp.ne.s32.totalorder %s93, %s109
      %p111 = scmp.eq.s32.totalorder %s22, 0
      %p112 = por %p110, %p111
      %s113 = ssub.s32 %s16, %s23
      %p114 = scmp.eq.s32.totalorder %s113, 0
      %s116 = sadd.s32 %s115, 1
      %s117 = scalar_select %p114, %s115, %s116
      %p120 = pneg %p114
      %p121 = scmp.eq.s32.totalorder %s16, 1
      %p122 = por %p120, %p121
      %p123 = scmp.ne.s32.totalorder %s115, %s118
      %p124 = scmp.eq.s32.totalorder %s16, 0
      %p125 = por %p123, %p124
      %p126 = scmp.ne.s32.totalorder %s115, %s118
      %p127 = scmp.eq.s32.totalorder %s21, 1
      %p128 = por %p126, %p127
      %p129 = scmp.ne.s32.totalorder %s118, %s119
      %p130 = scmp.eq.s32.totalorder %s21, 0
      %p131 = por %p129, %p130
      %p132 = scmp.ne.s32.totalorder %s118, %s119
      %p133 = scmp.eq.s32.totalorder %s22, 1
      %p134 = por %p132, %p133
      %p136 = scmp.ne.s32.totalorder %s119, %s135
      %p137 = scmp.eq.s32.totalorder %s22, 0
      %p138 = por %p136, %p137
      %p139 = scmp.le.s32.totalorder 1, %s16
      %p140 = scmp.lt.s32.totalorder %s16, 3
      %p141 = pnand %p139, %p140
      %p142 = pneg %p141
      // Predicated region
      $region9: #{tpu_custom_call.1} parent=5 // pred_check
        _
      $region10: #{tpu_custom_call.1} parent=5 // pred_check_branch
        %144 = sbr.rel (%p141) target = $region12
      $region11: #{tpu_custom_call.1} parent=5 // pred_region
        %s145 = ssub.s32 %s16, 1
        // Predicated region
        $region13: #{tpu_custom_call.1} parent=11 // pred_check
          %p146 = pneg %p37
        $region14: #{tpu_custom_call.1} parent=11 // pred_check_branch
          %148 = sbr.rel (%p146) target = $region16
        $region15: #{tpu_custom_call.1} parent=11 // pred_region
          _
        $region16: #{tpu_custom_call.1} parent=11 // pred_fallthru
          _
        // Predicated region
        $region17: #{tpu_custom_call.1} parent=11 // pred_check
          %p149 = pneg %p58
        $region18: #{tpu_custom_call.1} parent=11 // pred_check_branch
          %151 = sbr.rel (%p149) target = $region20
        $region19: #{tpu_custom_call.1} parent=11 // pred_region
          _
        $region20: #{tpu_custom_call.1} parent=11 // pred_fallthru
          _
        // Predicated region
        $region21: #{tpu_custom_call.1} parent=11 // pred_check
          %p152 = pneg %p79
        $region22: #{tpu_custom_call.1} parent=11 // pred_check_branch
          %154 = sbr.rel (%p152) target = $region24
        $region23: #{tpu_custom_call.1} parent=11 // pred_region
          _
        $region24: #{tpu_custom_call.1} parent=11 // pred_fallthru
          _
      $region12: #{tpu_custom_call.1} parent=5 // pred_fallthru
        _
      %p155 = scmp.lt.s32.totalorder %s16, 2
      // Predicated region
      $region25: #{tpu_custom_call.1} parent=5 // pred_check
        %p156 = pneg %p155
      $region26: #{tpu_custom_call.1} parent=5 // pred_check_branch
        %158 = sbr.rel (%p156) target = $region28
      $region27: #{tpu_custom_call.1} parent=5 // pred_region
        // Predicated region
        $region29: #{tpu_custom_call.1} parent=27 // pred_check
          %p159 = pneg %p99
        $region30: #{tpu_custom_call.1} parent=27 // pred_check_branch
          %161 = sbr.rel (%p159) target = $region32
        $region31: #{tpu_custom_call.1} parent=27 // pred_region
          %s162 = sand.u32 %s89, 1
          %s163 = scalar_lea.sflag [#allocation3], %s162
          %s164 = sand.u32 %s89, 1
          %s165 = smul.addr %s164, 256
          %s166 = scalar_lea.vmem [#allocation2], %s165
          %s167 = smul.u32 32, %s16
          %s169 = ssub.s32 4096, 4096
          %170 = vsyncadd %s163, %s169
          %s171 = smul.addr %s167, 128
          %s172 = scalar_lea.hbm %s3, %s171
          %s173 = sshll.u32 %s166, 4
          %s174 = int_to_ptr.vmem [resolvable:$true] %s173
          %179 = dma.hbm_to_vmem [thread:$0]  %s172, 4096, %s174, %s163, 128, 128, 8
        $region32: #{tpu_custom_call.1} parent=27 // pred_fallthru
          _
      $region28: #{tpu_custom_call.1} parent=5 // pred_fallthru
        _
      %p180 = scmp.le.s32.totalorder 1, %s16
      %p181 = scmp.lt.s32.totalorder %s16, 3
      %p182 = pnand %p180, %p181
      %p183 = pneg %p182
      // Predicated region
      $region33: #{tpu_custom_call.1} parent=5 // pred_check
        _
      $region34: #{tpu_custom_call.1} parent=5 // pred_check_branch
        %185 = sbr.rel (%p182) target = $region36
      $region35: #{tpu_custom_call.1} parent=5 // pred_region
        %s186 = ssub.s32 %s16, 1
        %s187 = sand.u32 %s92, 1
        %s188 = scalar_lea.sflag [#allocation3], %s187
        %s189 = sand.u32 %s92, 1
        %s190 = smul.addr %s189, 256
        %s191 = scalar_lea.vmem [#allocation2], %s190
        // Predicated region
        $region37: #{tpu_custom_call.1} parent=35 // pred_check
          %p192 = pneg %p105
        $region38: #{tpu_custom_call.1} parent=35 // pred_check_branch
          %194 = sbr.rel (%p192) target = $region40
        $region39: #{tpu_custom_call.1} parent=35 // pred_region
          %195 = dma.done %s188, 4096
        $region40: #{tpu_custom_call.1} parent=35 // pred_fallthru
          _
        %p196 = pneg %p37
        %p197 = pneg %p34
        %p198 = pneg %p58
        %p199 = pneg %p55
        %p200 = pneg %p79
        %p201 = pneg %p76
        %s202 = sand.u32 %s92, 1
        %s203 = scalar_lea.sflag [#allocation3], %s202
        %s204 = sand.u32 %s92, 1
        %s205 = smul.addr %s204, 256
        %s206 = scalar_lea.vmem [#allocation2], %s205
        %p207 = pneg %p105
        %p208 = pneg %p102
        %p209 = pneg %p131
        %p210 = pneg %p128
        %s211 = sand.u32 %s118, 1
        %s212 = scalar_lea.sflag [#allocation4], %s211
        %s213 = sand.u32 %s118, 1
        %s214 = smul.addr %s213, 256
        %s215 = scalar_lea.vmem [#allocation5], %s214
        %s216 = smul.u32 32, %s21
        %s217 = smul.u32 32, %s21
        %v218 = vld [vmem:[%s0] sm:$0xff]
        %v219 = vld [vmem:[%s0 + $0x8] sm:$0xff]
        %v220 = vld [vmem:[%s0 + $0x10] sm:$0xff]
        %v221 = vld [vmem:[%s0 + $0x18] sm:$0xff]
        %v222 = vld [vmem:[%s0 + $0x20] sm:$0xff]
        %v223 = vld [vmem:[%s0 + $0x28] sm:$0xff]
        %v224 = vld [vmem:[%s0 + $0x30] sm:$0xff]
        %v225 = vld [vmem:[%s0 + $0x38] sm:$0xff]
        %v226 = vld [vmem:[%s0 + $0x40] sm:$0xff]
        %v227 = vld [vmem:[%s0 + $0x48] sm:$0xff]
        %v228 = vld [vmem:[%s0 + $0x50] sm:$0xff]
        %v229 = vld [vmem:[%s0 + $0x58] sm:$0xff]
        %v230 = vld [vmem:[%s0 + $0x60] sm:$0xff]
        %v231 = vld [vmem:[%s0 + $0x68] sm:$0xff]
        %v232 = vld [vmem:[%s0 + $0x70] sm:$0xff]
        %v233 = vld [vmem:[%s0 + $0x78] sm:$0xff]
        %v234 = vld [vmem:[%s0 + $0x80] sm:$0xff]
        %v235 = vld [vmem:[%s0 + $0x88] sm:$0xff]
        %v236 = vld [vmem:[%s0 + $0x90] sm:$0xff]
        %v237 = vld [vmem:[%s0 + $0x98] sm:$0xff]
        %v238 = vld [vmem:[%s0 + $0xa0] sm:$0xff]
        %v239 = vld [vmem:[%s0 + $0xa8] sm:$0xff]
        %v240 = vld [vmem:[%s0 + $0xb0] sm:$0xff]
        %v241 = vld [vmem:[%s0 + $0xb8] sm:$0xff]
        %v242 = vld [vmem:[%s0 + $0xc0] sm:$0xff]
        %v243 = vld [vmem:[%s0 + $0xc8] sm:$0xff]
        %v244 = vld [vmem:[%s0 + $0xd0] sm:$0xff]
        %v245 = vld [vmem:[%s0 + $0xd8] sm:$0xff]
        %v246 = vld [vmem:[%s0 + $0xe0] sm:$0xff]
        %v247 = vld [vmem:[%s0 + $0xe8] sm:$0xff]
        %v248 = vld [vmem:[%s0 + $0xf0] sm:$0xff]
        %v249 = vld [vmem:[%s0 + $0xf8] sm:$0xff]
        %v250 = vld [vmem:[%s1] sm:$0x3]
        %v251 = vld [vmem:[%s2] sm:$0x1]
        %253 = vset.pattern.permute.xlu0 0
        %254 = vperm.xlu0 %253, %v218
        %v255 = vpop.permute.xlu0 %254
        %258 = vset.pattern.permute.xlu0 0
        %259 = vperm.xlu0 %258, %v219
        %v260 = vpop.permute.xlu0 %259
        %263 = vset.pattern.permute.xlu0 0
        %264 = vperm.xlu0 %263, %v220
        %v265 = vpop.permute.xlu0 %264
        %268 = vset.pattern.permute.xlu0 0
        %269 = vperm.xlu0 %268, %v221
        %v270 = vpop.permute.xlu0 %269
        %273 = vset.pattern.permute.xlu0 0
        %274 = vperm.xlu0 %273, %v222
        %v275 = vpop.permute.xlu0 %274
        %278 = vset.pattern.permute.xlu0 0
        %279 = vperm.xlu0 %278, %v223
        %v280 = vpop.permute.xlu0 %279
        %283 = vset.pattern.permute.xlu0 0
        %284 = vperm.xlu0 %283, %v224
        %v285 = vpop.permute.xlu0 %284
        %288 = vset.pattern.permute.xlu0 0
        %289 = vperm.xlu0 %288, %v225
        %v290 = vpop.permute.xlu0 %289
        %293 = vset.pattern.permute.xlu0 0
        %294 = vperm.xlu0 %293, %v226
        %v295 = vpop.permute.xlu0 %294
        %298 = vset.pattern.permute.xlu0 0
        %299 = vperm.xlu0 %298, %v227
        %v300 = vpop.permute.xlu0 %299
        %303 = vset.pattern.permute.xlu0 0
        %304 = vperm.xlu0 %303, %v228
        %v305 = vpop.permute.xlu0 %304
        %308 = vset.pattern.permute.xlu0 0
        %309 = vperm.xlu0 %308, %v229
        %v310 = vpop.permute.xlu0 %309
        %313 = vset.pattern.permute.xlu0 0
        %314 = vperm.xlu0 %313, %v230
        %v315 = vpop.permute.xlu0 %314
        %318 = vset.pattern.permute.xlu0 0
        %319 = vperm.xlu0 %318, %v231
        %v320 = vpop.permute.xlu0 %319
        %323 = vset.pattern.permute.xlu0 0
        %324 = vperm.xlu0 %323, %v232
        %v325 = vpop.permute.xlu0 %324
        %328 = vset.pattern.permute.xlu0 0
        %329 = vperm.xlu0 %328, %v233
        %v330 = vpop.permute.xlu0 %329
        %333 = vset.pattern.permute.xlu0 0
        %334 = vperm.xlu0 %333, %v234
        %v335 = vpop.permute.xlu0 %334
        %338 = vset.pattern.permute.xlu0 0
        %339 = vperm.xlu0 %338, %v235
        %v340 = vpop.permute.xlu0 %339
        %343 = vset.pattern.permute.xlu0 0
        %344 = vperm.xlu0 %343, %v236
        %v345 = vpop.permute.xlu0 %344
        %348 = vset.pattern.permute.xlu0 0
        %349 = vperm.xlu0 %348, %v237
        %v350 = vpop.permute.xlu0 %349
        %353 = vset.pattern.permute.xlu0 0
        %354 = vperm.xlu0 %353, %v238
        %v355 = vpop.permute.xlu0 %354
        %358 = vset.pattern.permute.xlu0 0
        %359 = vperm.xlu0 %358, %v239
        %v360 = vpop.permute.xlu0 %359
        %363 = vset.pattern.permute.xlu0 0
        %364 = vperm.xlu0 %363, %v240
        %v365 = vpop.permute.xlu0 %364
        %368 = vset.pattern.permute.xlu0 0
        %369 = vperm.xlu0 %368, %v241
        %v370 = vpop.permute.xlu0 %369
        %373 = vset.pattern.permute.xlu0 0
        %374 = vperm.xlu0 %373, %v242
        %v375 = vpop.permute.xlu0 %374
        %378 = vset.pattern.permute.xlu0 0
        %379 = vperm.xlu0 %378, %v243
        %v380 = vpop.permute.xlu0 %379
        %383 = vset.pattern.permute.xlu0 0
        %384 = vperm.xlu0 %383, %v244
        %v385 = vpop.permute.xlu0 %384
        %388 = vset.pattern.permute.xlu0 0
        %389 = vperm.xlu0 %388, %v245
        %v390 = vpop.permute.xlu0 %389
        %393 = vset.pattern.permute.xlu0 0
        %394 = vperm.xlu0 %393, %v246
        %v395 = vpop.permute.xlu0 %394
        %398 = vset.pattern.permute.xlu0 0
        %399 = vperm.xlu0 %398, %v247
        %v400 = vpop.permute.xlu0 %399
        %403 = vset.pattern.permute.xlu0 0
        %404 = vperm.xlu0 %403, %v248
        %v405 = vpop.permute.xlu0 %404
        %408 = vset.pattern.permute.xlu0 0
        %409 = vperm.xlu0 %408, %v249
        %v410 = vpop.permute.xlu0 %409
        %v412 = vlaneseq
        %v413 = vshrl.u32 %v412, 7
        %v414 = vsub.s32 0, %v413
        %v415 = vrot.slane %v250, %v414
        %v416 = vmul.f32 %v255, %v415
        %v417 = vmul.f32 %v260, %v415
        %v418 = vmul.f32 %v265, %v415
        %v419 = vmul.f32 %v270, %v415
        %v420 = vmul.f32 %v275, %v415
        %v421 = vmul.f32 %v280, %v415
        %v422 = vmul.f32 %v285, %v415
        %v423 = vmul.f32 %v290, %v415
        %v424 = vmul.f32 %v295, %v415
        %v425 = vmul.f32 %v300, %v415
        %v426 = vmul.f32 %v305, %v415
        %v427 = vmul.f32 %v310, %v415
        %v428 = vmul.f32 %v315, %v415
        %v429 = vmul.f32 %v320, %v415
        %v430 = vmul.f32 %v325, %v415
        %v431 = vmul.f32 %v330, %v415
        %v432 = vmul.f32 %v335, %v415
        %v433 = vmul.f32 %v340, %v415
        %v434 = vmul.f32 %v345, %v415
        %v435 = vmul.f32 %v350, %v415
        %v436 = vmul.f32 %v355, %v415
        %v437 = vmul.f32 %v360, %v415
        %v438 = vmul.f32 %v365, %v415
        %v439 = vmul.f32 %v370, %v415
        %v440 = vmul.f32 %v375, %v415
        %v441 = vmul.f32 %v380, %v415
        %v442 = vmul.f32 %v385, %v415
        %v443 = vmul.f32 %v390, %v415
        %v444 = vmul.f32 %v395, %v415
        %v445 = vmul.f32 %v400, %v415
        %v446 = vmul.f32 %v405, %v415
        %v447 = vmul.f32 %v410, %v415
        %v449 = vlaneseq
        %v450 = vshrl.u32 %v449, 7
        %v451 = vsub.s32 0, %v450
        %v452 = vrot.slane %v251, %v451
        %v454 = vadd.f32 %v452, %v416
        %v455 = vadd.f32 %v452, %v417
        %v456 = vadd.f32 %v452, %v418
        %v457 = vadd.f32 %v452, %v419
        %v458 = vadd.f32 %v452, %v420
        %v459 = vadd.f32 %v452, %v421
        %v460 = vadd.f32 %v452, %v422
        %v461 = vadd.f32 %v452, %v423
        %v462 = vadd.f32 %v452, %v424
        %v463 = vadd.f32 %v452, %v425
        %v464 = vadd.f32 %v452, %v426
        %v465 = vadd.f32 %v452, %v427
        %v466 = vadd.f32 %v452, %v428
        %v467 = vadd.f32 %v452, %v429
        %v468 = vadd.f32 %v452, %v430
        %v469 = vadd.f32 %v452, %v431
        %v470 = vadd.f32 %v452, %v432
        %v471 = vadd.f32 %v452, %v433
        %v472 = vadd.f32 %v452, %v434
        %v473 = vadd.f32 %v452, %v435
        %v474 = vadd.f32 %v452, %v436
        %v475 = vadd.f32 %v452, %v437
        %v476 = vadd.f32 %v452, %v438
        %v477 = vadd.f32 %v452, %v439
        %v478 = vadd.f32 %v452, %v440
        %v479 = vadd.f32 %v452, %v441
        %v480 = vadd.f32 %v452, %v442
        %v481 = vadd.f32 %v452, %v443
        %v482 = vadd.f32 %v452, %v444
        %v483 = vadd.f32 %v452, %v445
        %v484 = vadd.f32 %v452, %v446
        %v485 = vadd.f32 %v452, %v447
        %486 = vset.pattern.permute.xlu0 1
        %487 = vperm.xlu0 %486, %v218
        %v488 = vpop.permute.xlu0 %487
        %490 = vset.pattern.permute.xlu0 1
        %491 = vperm.xlu0 %490, %v219
        %v492 = vpop.permute.xlu0 %491
        %494 = vset.pattern.permute.xlu0 1
        %495 = vperm.xlu0 %494, %v220
        %v496 = vpop.permute.xlu0 %495
        %498 = vset.pattern.permute.xlu0 1
        %499 = vperm.xlu0 %498, %v221
        %v500 = vpop.permute.xlu0 %499
        %502 = vset.pattern.permute.xlu0 1
        %503 = vperm.xlu0 %502, %v222
        %v504 = vpop.permute.xlu0 %503
        %506 = vset.pattern.permute.xlu0 1
        %507 = vperm.xlu0 %506, %v223
        %v508 = vpop.permute.xlu0 %507
        %510 = vset.pattern.permute.xlu0 1
        %511 = vperm.xlu0 %510, %v224
        %v512 = vpop.permute.xlu0 %511
        %514 = vset.pattern.permute.xlu0 1
        %515 = vperm.xlu0 %514, %v225
        %v516 = vpop.permute.xlu0 %515
        %518 = vset.pattern.permute.xlu0 1
        %519 = vperm.xlu0 %518, %v226
        %v520 = vpop.permute.xlu0 %519
        %522 = vset.pattern.permute.xlu0 1
        %523 = vperm.xlu0 %522, %v227
        %v524 = vpop.permute.xlu0 %523
        %526 = vset.pattern.permute.xlu0 1
        %527 = vperm.xlu0 %526, %v228
        %v528 = vpop.permute.xlu0 %527
        %530 = vset.pattern.permute.xlu0 1
        %531 = vperm.xlu0 %530, %v229
        %v532 = vpop.permute.xlu0 %531
        %534 = vset.pattern.permute.xlu0 1
        %535 = vperm.xlu0 %534, %v230
        %v536 = vpop.permute.xlu0 %535
        %538 = vset.pattern.permute.xlu0 1
        %539 = vperm.xlu0 %538, %v231
        %v540 = vpop.permute.xlu0 %539
        %542 = vset.pattern.permute.xlu0 1
        %543 = vperm.xlu0 %542, %v232
        %v544 = vpop.permute.xlu0 %543
        %546 = vset.pattern.permute.xlu0 1
        %547 = vperm.xlu0 %546, %v233
        %v548 = vpop.permute.xlu0 %547
        %550 = vset.pattern.permute.xlu0 1
        %551 = vperm.xlu0 %550, %v234
        %v552 = vpop.permute.xlu0 %551
        %554 = vset.pattern.permute.xlu0 1
        %555 = vperm.xlu0 %554, %v235
        %v556 = vpop.permute.xlu0 %555
        %558 = vset.pattern.permute.xlu0 1
        %559 = vperm.xlu0 %558, %v236
        %v560 = vpop.permute.xlu0 %559
        %562 = vset.pattern.permute.xlu0 1
        %563 = vperm.xlu0 %562, %v237
        %v564 = vpop.permute.xlu0 %563
        %566 = vset.pattern.permute.xlu0 1
        %567 = vperm.xlu0 %566, %v238
        %v568 = vpop.permute.xlu0 %567
        %570 = vset.pattern.permute.xlu0 1
        %571 = vperm.xlu0 %570, %v239
        %v572 = vpop.permute.xlu0 %571
        %574 = vset.pattern.permute.xlu0 1
        %575 = vperm.xlu0 %574, %v240
        %v576 = vpop.permute.xlu0 %575
        %578 = vset.pattern.permute.xlu0 1
        %579 = vperm.xlu0 %578, %v241
        %v580 = vpop.permute.xlu0 %579
        %582 = vset.pattern.permute.xlu0 1
        %583 = vperm.xlu0 %582, %v242
        %v584 = vpop.permute.xlu0 %583
        %586 = vset.pattern.permute.xlu0 1
        %587 = vperm.xlu0 %586, %v243
        %v588 = vpop.permute.xlu0 %587
        %590 = vset.pattern.permute.xlu0 1
        %591 = vperm.xlu0 %590, %v244
        %v592 = vpop.permute.xlu0 %591
        %594 = vset.pattern.permute.xlu0 1
        %595 = vperm.xlu0 %594, %v245
        %v596 = vpop.permute.xlu0 %595
        %598 = vset.pattern.permute.xlu0 1
        %599 = vperm.xlu0 %598, %v246
        %v600 = vpop.permute.xlu0 %599
        %602 = vset.pattern.permute.xlu0 1
        %603 = vperm.xlu0 %602, %v247
        %v604 = vpop.permute.xlu0 %603
        %606 = vset.pattern.permute.xlu0 1
        %607 = vperm.xlu0 %606, %v248
        %v608 = vpop.permute.xlu0 %607
        %610 = vset.pattern.permute.xlu0 1
        %611 = vperm.xlu0 %610, %v249
        %v612 = vpop.permute.xlu0 %611
        %v614 = vlaneseq
        %v615 = vshrl.u32 %v614, 7
        %v616 = vsub.s32 1, %v615
        %v617 = vrot.slane %v250, %v616
        %v618 = vmul.f32 %v488, %v617
        %v619 = vmul.f32 %v492, %v617
        %v620 = vmul.f32 %v496, %v617
        %v621 = vmul.f32 %v500, %v617
        %v622 = vmul.f32 %v504, %v617
        %v623 = vmul.f32 %v508, %v617
        %v624 = vmul.f32 %v512, %v617
        %v625 = vmul.f32 %v516, %v617
        %v626 = vmul.f32 %v520, %v617
        %v627 = vmul.f32 %v524, %v617
        %v628 = vmul.f32 %v528, %v617
        %v629 = vmul.f32 %v532, %v617
        %v630 = vmul.f32 %v536, %v617
        %v631 = vmul.f32 %v540, %v617
        %v632 = vmul.f32 %v544, %v617
        %v633 = vmul.f32 %v548, %v617
        %v634 = vmul.f32 %v552, %v617
        %v635 = vmul.f32 %v556, %v617
        %v636 = vmul.f32 %v560, %v617
        %v637 = vmul.f32 %v564, %v617
        %v638 = vmul.f32 %v568, %v617
        %v639 = vmul.f32 %v572, %v617
        %v640 = vmul.f32 %v576, %v617
        %v641 = vmul.f32 %v580, %v617
        %v642 = vmul.f32 %v584, %v617
        %v643 = vmul.f32 %v588, %v617
        %v644 = vmul.f32 %v592, %v617
        %v645 = vmul.f32 %v596, %v617
        %v646 = vmul.f32 %v600, %v617
        %v647 = vmul.f32 %v604, %v617
        %v648 = vmul.f32 %v608, %v617
        %v649 = vmul.f32 %v612, %v617
        %v650 = vadd.f32 %v454, %v618
        %v651 = vadd.f32 %v455, %v619
        %v652 = vadd.f32 %v456, %v620
        %v653 = vadd.f32 %v457, %v621
        %v654 = vadd.f32 %v458, %v622
        %v655 = vadd.f32 %v459, %v623
        %v656 = vadd.f32 %v460, %v624
        %v657 = vadd.f32 %v461, %v625
        %v658 = vadd.f32 %v462, %v626
        %v659 = vadd.f32 %v463, %v627
        %v660 = vadd.f32 %v464, %v628
        %v661 = vadd.f32 %v465, %v629
        %v662 = vadd.f32 %v466, %v630
        %v663 = vadd.f32 %v467, %v631
        %v664 = vadd.f32 %v468, %v632
        %v665 = vadd.f32 %v469, %v633
        %v666 = vadd.f32 %v470, %v634
        %v667 = vadd.f32 %v471, %v635
        %v668 = vadd.f32 %v472, %v636
        %v669 = vadd.f32 %v473, %v637
        %v670 = vadd.f32 %v474, %v638
        %v671 = vadd.f32 %v475, %v639
        %v672 = vadd.f32 %v476, %v640
        %v673 = vadd.f32 %v477, %v641
        %v674 = vadd.f32 %v478, %v642
        %v675 = vadd.f32 %v479, %v643
        %v676 = vadd.f32 %v480, %v644
        %v677 = vadd.f32 %v481, %v645
        %v678 = vadd.f32 %v482, %v646
        %v679 = vadd.f32 %v483, %v647
        %v680 = vadd.f32 %v484, %v648
        %v681 = vadd.f32 %v485, %v649
        %v682 = vld [vmem:[%s191] sm:$0xff]
        %v683 = vld [vmem:[%s191 + $0x8] sm:$0xff]
        %v684 = vld [vmem:[%s191 + $0x10] sm:$0xff]
        %v685 = vld [vmem:[%s191 + $0x18] sm:$0xff]
        %v686 = vld [vmem:[%s191 + $0x20] sm:$0xff]
        %v687 = vld [vmem:[%s191 + $0x28] sm:$0xff]
        %v688 = vld [vmem:[%s191 + $0x30] sm:$0xff]
        %v689 = vld [vmem:[%s191 + $0x38] sm:$0xff]
        %v690 = vld [vmem:[%s191 + $0x40] sm:$0xff]
        %v691 = vld [vmem:[%s191 + $0x48] sm:$0xff]
        %v692 = vld [vmem:[%s191 + $0x50] sm:$0xff]
        %v693 = vld [vmem:[%s191 + $0x58] sm:$0xff]
        %v694 = vld [vmem:[%s191 + $0x60] sm:$0xff]
        %v695 = vld [vmem:[%s191 + $0x68] sm:$0xff]
        %v696 = vld [vmem:[%s191 + $0x70] sm:$0xff]
        %v697 = vld [vmem:[%s191 + $0x78] sm:$0xff]
        %v698 = vld [vmem:[%s191 + $0x80] sm:$0xff]
        %v699 = vld [vmem:[%s191 + $0x88] sm:$0xff]
        %v700 = vld [vmem:[%s191 + $0x90] sm:$0xff]
        %v701 = vld [vmem:[%s191 + $0x98] sm:$0xff]
        %v702 = vld [vmem:[%s191 + $0xa0] sm:$0xff]
        %v703 = vld [vmem:[%s191 + $0xa8] sm:$0xff]
        %v704 = vld [vmem:[%s191 + $0xb0] sm:$0xff]
        %v705 = vld [vmem:[%s191 + $0xb8] sm:$0xff]
        %v706 = vld [vmem:[%s191 + $0xc0] sm:$0xff]
        %v707 = vld [vmem:[%s191 + $0xc8] sm:$0xff]
        %v708 = vld [vmem:[%s191 + $0xd0] sm:$0xff]
        %v709 = vld [vmem:[%s191 + $0xd8] sm:$0xff]
        %v710 = vld [vmem:[%s191 + $0xe0] sm:$0xff]
        %v711 = vld [vmem:[%s191 + $0xe8] sm:$0xff]
        %v712 = vld [vmem:[%s191 + $0xf0] sm:$0xff]
        %v713 = vld [vmem:[%s191 + $0xf8] sm:$0xff]
        %v714 = vadd.f32 %v682, %v650
        %v715 = vadd.f32 %v683, %v651
        %v716 = vadd.f32 %v684, %v652
        %v717 = vadd.f32 %v685, %v653
        %v718 = vadd.f32 %v686, %v654
        %v719 = vadd.f32 %v687, %v655
        %v720 = vadd.f32 %v688, %v656
        %v721 = vadd.f32 %v689, %v657
        %v722 = vadd.f32 %v690, %v658
        %v723 = vadd.f32 %v691, %v659
        %v724 = vadd.f32 %v692, %v660
        %v725 = vadd.f32 %v693, %v661
        %v726 = vadd.f32 %v694, %v662
        %v727 = vadd.f32 %v695, %v663
        %v728 = vadd.f32 %v696, %v664
        %v729 = vadd.f32 %v697, %v665
        %v730 = vadd.f32 %v698, %v666
        %v731 = vadd.f32 %v699, %v667
        %v732 = vadd.f32 %v700, %v668
        %v733 = vadd.f32 %v701, %v669
        %v734 = vadd.f32 %v702, %v670
        %v735 = vadd.f32 %v703, %v671
        %v736 = vadd.f32 %v704, %v672
        %v737 = vadd.f32 %v705, %v673
        %v738 = vadd.f32 %v706, %v674
        %v739 = vadd.f32 %v707, %v675
        %v740 = vadd.f32 %v708, %v676
        %v741 = vadd.f32 %v709, %v677
        %v742 = vadd.f32 %v710, %v678
        %v743 = vadd.f32 %v711, %v679
        %v744 = vadd.f32 %v712, %v680
        %v745 = vadd.f32 %v713, %v681
        %746 = vst [vmem:[%s215] sm:$0xff] %v714
        %747 = vst [vmem:[%s215 + $0x8] sm:$0xff] %v715
        %748 = vst [vmem:[%s215 + $0x10] sm:$0xff] %v716
        %749 = vst [vmem:[%s215 + $0x18] sm:$0xff] %v717
        %750 = vst [vmem:[%s215 + $0x20] sm:$0xff] %v718
        %751 = vst [vmem:[%s215 + $0x28] sm:$0xff] %v719
        %752 = vst [vmem:[%s215 + $0x30] sm:$0xff] %v720
        %753 = vst [vmem:[%s215 + $0x38] sm:$0xff] %v721
        %754 = vst [vmem:[%s215 + $0x40] sm:$0xff] %v722
        %755 = vst [vmem:[%s215 + $0x48] sm:$0xff] %v723
        %756 = vst [vmem:[%s215 + $0x50] sm:$0xff] %v724
        %757 = vst [vmem:[%s215 + $0x58] sm:$0xff] %v725
        %758 = vst [vmem:[%s215 + $0x60] sm:$0xff] %v726
        %759 = vst [vmem:[%s215 + $0x68] sm:$0xff] %v727
        %760 = vst [vmem:[%s215 + $0x70] sm:$0xff] %v728
        %761 = vst [vmem:[%s215 + $0x78] sm:$0xff] %v729
        %762 = vst [vmem:[%s215 + $0x80] sm:$0xff] %v730
        %763 = vst [vmem:[%s215 + $0x88] sm:$0xff] %v731
        %764 = vst [vmem:[%s215 + $0x90] sm:$0xff] %v732
        %765 = vst [vmem:[%s215 + $0x98] sm:$0xff] %v733
        %766 = vst [vmem:[%s215 + $0xa0] sm:$0xff] %v734
        %767 = vst [vmem:[%s215 + $0xa8] sm:$0xff] %v735
        %768 = vst [vmem:[%s215 + $0xb0] sm:$0xff] %v736
        %769 = vst [vmem:[%s215 + $0xb8] sm:$0xff] %v737
        %770 = vst [vmem:[%s215 + $0xc0] sm:$0xff] %v738
        %771 = vst [vmem:[%s215 + $0xc8] sm:$0xff] %v739
        %772 = vst [vmem:[%s215 + $0xd0] sm:$0xff] %v740
        %773 = vst [vmem:[%s215 + $0xd8] sm:$0xff] %v741
        %774 = vst [vmem:[%s215 + $0xe0] sm:$0xff] %v742
        %775 = vst [vmem:[%s215 + $0xe8] sm:$0xff] %v743
        %776 = vst [vmem:[%s215 + $0xf0] sm:$0xff] %v744
        %777 = vst [vmem:[%s215 + $0xf8] sm:$0xff] %v745
        %s778 = sand.u32 %s118, 1
        %s779 = scalar_lea.sflag [#allocation4], %s778
        %s780 = sand.u32 %s118, 1
        %s781 = smul.addr %s780, 256
        %s782 = scalar_lea.vmem [#allocation5], %s781
        // Predicated region
        $region41: #{tpu_custom_call.1} parent=35 // pred_check
          %p783 = pneg %p128
        $region42: #{tpu_custom_call.1} parent=35 // pred_check_branch
          %785 = sbr.rel (%p783) target = $region44
        $region43: #{tpu_custom_call.1} parent=35 // pred_region
          %s786 = smul.u32 32, %s21
          %s788 = ssub.s32 4096, 4096
          %789 = vsyncadd %s779, %s788
          %s790 = smul.addr %s786, 128
          %s791 = scalar_lea.hbm %s4, %s790
          %s792 = sshll.u32 %s782, 4
          %s793 = int_to_ptr.vmem [resolvable:$true] %s792
          %798 = dma.vmem_to_hbm [thread:$0]  %s793, 4096, %s791, %s779, 128, 128, 8
        $region44: #{tpu_custom_call.1} parent=35 // pred_fallthru
          _
      $region36: #{tpu_custom_call.1} parent=5 // pred_fallthru
        _
      %p799 = scmp.le.s32.totalorder 2, %s16
      // Predicated region
      $region45: #{tpu_custom_call.1} parent=5 // pred_check
        %p800 = pneg %p799
      $region46: #{tpu_custom_call.1} parent=5 // pred_check_branch
        %802 = sbr.rel (%p800) target = $region48
      $region47: #{tpu_custom_call.1} parent=5 // pred_region
        %s803 = ssub.s32 %s16, 2
        // Predicated region
        $region49: #{tpu_custom_call.1} parent=47 // pred_check
          %p804 = pneg %p134
        $region50: #{tpu_custom_call.1} parent=47 // pred_check_branch
          %806 = sbr.rel (%p804) target = $region52
        $region51: #{tpu_custom_call.1} parent=47 // pred_region
          %s807 = sand.u32 %s119, 1
          %s808 = scalar_lea.sflag [#allocation4], %s807
          %s809 = sand.u32 %s119, 1
          %s810 = smul.addr %s809, 256
          %s811 = scalar_lea.vmem [#allocation5], %s810
          %812 = dma.done %s808, 4096
        $region52: #{tpu_custom_call.1} parent=47 // pred_fallthru
          _
      $region48: #{tpu_custom_call.1} parent=5 // pred_fallthru
        _
    $region6: #{tpu_custom_call.1} parent=1 // loop_footer
      %s20 = sadd.s32 1, %s16
    $region7: #{tpu_custom_call.1} parent=1 // loop_footer_branch
      %15 = sbr.rel target = $region3
    $region8: #{tpu_custom_call.1} parent=1 // loop_exit
      _
    %813 = vsyncpa [#allocation3], 1
    %s814 = scalar_lea.sflag [#allocation3], 1
    %815 = vsyncpa %s814, 1
    %816 = vsyncpa [#allocation4], 1
    %s817 = scalar_lea.sflag [#allocation4], 1
    %818 = vsyncpa %s817, 1

</llo_original>
